<compile_context>
chip_gen: v6e
topology: v6e:2x2x1
jax: 0.10.0
libtpu: 0.0.40
codegen_flags: <defaults>
</compile_context>

<pallas_src>
import jax
import jax.numpy as jnp
from jax.experimental import pallas as pl
from jax.experimental.pallas import tpu as pltpu


def _diag_gaussian_small_kernel(x_ref, w_ref, b_ref, logstd_ref, mean_ref, std_ref):
    # mean = x @ W^T + b   (MXU + VPU epilogue); std row = exp(logstd) (EUP).
    mean = jnp.dot(x_ref[...], w_ref[...], preferred_element_type=jnp.float32)
    mean_ref[...] = (mean + b_ref[...]).astype(mean_ref.dtype)
    std_ref[...] = jnp.exp(logstd_ref[...]).astype(std_ref.dtype)   # [1, Dout] only


def _linear_tile_kernel(x_ref, w_ref, b_ref, mean_ref):
    # One batch tile of the fc_mean linear layer.
    mean = jnp.dot(x_ref[...], w_ref[...], preferred_element_type=jnp.float32)
    mean_ref[...] = (mean + b_ref[...]).astype(mean_ref.dtype)


def diag_gaussian_forward(x, w_t, b, logstd, *, block_b=1024):
    """Returns (action_mean, action_std) of the diagonal Gaussian policy dist.

    x:      [B, Din]    float32
    w_t:    [Din, Dout] float32  (fc_mean.weight transposed)
    b:      [Dout]      float32  (fc_mean.bias)
    logstd: [Dout]      float32  (AddBias parameter)
    block_b: batch tile size for the large-batch (RL rollout) path; multiple of 8.
    """
    B, Din = x.shape
    Dout = w_t.shape[1]
    b2 = b.reshape(1, Dout).astype(jnp.float32)
    logstd2 = logstd.reshape(1, Dout).astype(jnp.float32)
    x = x.astype(jnp.float32)
    w_t = w_t.astype(jnp.float32)

    if B <= block_b:
        # Grid-less call: whole problem lives in VMEM, no pipeline overhead.
        vmem = pltpu.MemorySpace.VMEM
        mean, std_row = pl.pallas_call(
            _diag_gaussian_small_kernel,
            out_shape=(
                jax.ShapeDtypeStruct((B, Dout), jnp.float32),   # mean
                jax.ShapeDtypeStruct((1, Dout), jnp.float32),   # std row (not broadcast)
            ),
            in_specs=[
                pl.BlockSpec(memory_space=vmem),   # x
                pl.BlockSpec(memory_space=vmem),   # w_t
                pl.BlockSpec(memory_space=vmem),   # bias
                pl.BlockSpec(memory_space=vmem),   # logstd
            ],
            out_specs=(
                pl.BlockSpec(memory_space=vmem),
                pl.BlockSpec(memory_space=vmem),
            ),
        )(x, w_t, b2, logstd2)
        std = jnp.broadcast_to(std_row, mean.shape)
        return mean, std

    # Large-batch path: tile over B so the x-tile DMA double-buffers against
    # compute and the batch axis can be sharded across TensorCores (v7x).
    tb = block_b
    assert tb % 8 == 0, "batch tile must be a multiple of 8 (f32 sublane)"
    b_pad = pl.cdiv(B, tb) * tb
    xp = x if b_pad == B else jnp.pad(x, ((0, b_pad - B), (0, 0)))

    # VMEM budget per core (worst case double-buffered x + mean tiles + resident
    # weight/bias): 2*tb*(Din+Dout)*4 + Din*Dout*4 + Dout*4 bytes.  At the
    # default tb=1024, Din=32, Dout=8 this is ~0.3 MiB — far under even v7x's
    # 64 MiB, so the default scoped-VMEM limit is left untouched.
    mean_p = pl.pallas_call(
        _linear_tile_kernel,
        out_shape=jax.ShapeDtypeStruct((b_pad, Dout), jnp.float32),
        grid=(b_pad // tb,),
        in_specs=[
            pl.BlockSpec((tb, Din), lambda i: (i, 0)),    # x: streamed per tile
            pl.BlockSpec((Din, Dout), lambda i: (0, 0)),  # weight: resident
            pl.BlockSpec((1, Dout), lambda i: (0, 0)),    # bias: resident
        ],
        out_specs=pl.BlockSpec((tb, Dout), lambda i: (i, 0)),
        compiler_params=pltpu.CompilerParams(
            dimension_semantics=("parallel",)),
    )(xp, w_t, b2)

    mean = mean_p[:B]
    # std does not depend on x: compute exp outside the kernel and broadcast
    # lazily instead of writing a full [B, Dout] array from the kernel.
    std = jnp.broadcast_to(jnp.exp(logstd2), mean.shape)
    return mean, std


def _orthogonal_init(key, rows, cols):
    # Deterministic stand-in for nn.init.orthogonal_ (gain=1).
    a = jax.random.normal(key, (max(rows, cols), min(rows, cols)), dtype=jnp.float32)
    q, r = jnp.linalg.qr(a)
    q = q * jnp.sign(jnp.diagonal(r))[None, :]
    if rows < cols:
        q = q.T
    return q[:rows, :cols]


if __name__ == "__main__":
    # Shapes implied by the module: x is [batch, num_inputs]; Linear -> num_outputs.
    num_inputs, num_outputs = 32, 8

    key = jax.random.PRNGKey(0)
    kx, kw, kx2 = jax.random.split(key, 3)

    # fc_mean: orthogonal weight [num_outputs, num_inputs], zero bias.
    w = _orthogonal_init(kw, num_outputs, num_inputs)        # [Dout, Din]
    b = jnp.zeros((num_outputs,), dtype=jnp.float32)
    # AddBias(torch.zeros(num_outputs)) -> logstd parameter initialized to 0.
    logstd = jnp.zeros((num_outputs,), dtype=jnp.float32)

    # --- small-batch (grid-less) path -------------------------------------
    B = 8
    x = jax.random.normal(kx, (B, num_inputs), dtype=jnp.float32)
    mean, std = diag_gaussian_forward(x, w.T, b, logstd)
    jax.block_until_ready((mean, std))

    ref_mean = x @ w.T + b
    ref_std = jnp.broadcast_to(jnp.exp(logstd), ref_mean.shape)
    assert mean.shape == ref_mean.shape and std.shape == ref_std.shape
    assert jnp.allclose(mean, ref_mean, atol=1e-5), "mean mismatch (small path)"
    assert jnp.allclose(std, ref_std, atol=1e-6), "std mismatch (small path)"

    # --- tiled (rollout-sized) path, exercised at a small scale -----------
    B2 = 40                                                  # not a tile multiple -> pad/slice
    x2 = jax.random.normal(kx2, (B2, num_inputs), dtype=jnp.float32)
    mean2, std2 = diag_gaussian_forward(x2, w.T, b, logstd, block_b=16)
    jax.block_until_ready((mean2, std2))

    ref_mean2 = x2 @ w.T + b
    ref_std2 = jnp.broadcast_to(jnp.exp(logstd), ref_mean2.shape)
    assert mean2.shape == ref_mean2.shape and std2.shape == ref_std2.shape
    assert jnp.allclose(mean2, ref_mean2, atol=1e-5), "mean mismatch (tiled path)"
    assert jnp.allclose(std2, ref_std2, atol=1e-6), "std mismatch (tiled path)"

    # TODO(synk): use_double (float64) path has no TPU Pallas equivalent; the
    # FixedNormal distribution object (log_prob/entropy) is consumed downstream
    # and is fully parameterized by the (mean, std) returned here.
    print("KERNEL_OK")
</pallas_src>

<mosaic_0001>
module attributes {stable_mosaic.version = 11 : i64} {
  func.func @_diag_gaussian_small_kernel(%arg0: memref<8x32xf32, #tpu.memory_space<vmem>>, %arg1: memref<32x8xf32, #tpu.memory_space<vmem>>, %arg2: memref<1x8xf32, #tpu.memory_space<vmem>>, %arg3: memref<1x8xf32, #tpu.memory_space<vmem>>, %arg4: memref<8x8xf32, #tpu.memory_space<vmem>>, %arg5: memref<1x8xf32, #tpu.memory_space<vmem>>) attributes {dimension_semantics = [], scalar_prefetch = 0 : i64, scratch_operands = 0 : i64, tpu.core_type = #tpu.core_type<tc>} {
    %c0 = arith.constant 0 : index
    %c0_0 = arith.constant 0 : index
    %0 = vector.load %arg0[%c0, %c0_0] : memref<8x32xf32, #tpu.memory_space<vmem>>, vector<8x32xf32>
    %c0_1 = arith.constant 0 : index
    %c0_2 = arith.constant 0 : index
    %1 = vector.load %arg1[%c0_1, %c0_2] : memref<32x8xf32, #tpu.memory_space<vmem>>, vector<32x8xf32>
    %cst = arith.constant dense<0.000000e+00> : vector<8x8xf32>
    %2 = tpu.matmul %0, %1, %cst {dimension_numbers = #tpu.dot_dimension_numbers<[1], [0], [0], [1], [0, 0, 1, 1], [], []>} : vector<8x32xf32>, vector<32x8xf32>, vector<8x8xf32> -> vector<8x8xf32>
    %c0_3 = arith.constant 0 : index
    %c0_4 = arith.constant 0 : index
    %3 = vector.load %arg2[%c0_3, %c0_4] : memref<1x8xf32, #tpu.memory_space<vmem>>, vector<1x8xf32>
    %4 = vector.broadcast %3 : vector<1x8xf32> to vector<8x8xf32>
    %5 = arith.addf %2, %4 : vector<8x8xf32>
    %c0_5 = arith.constant 0 : index
    %c0_6 = arith.constant 0 : index
    %6 = vector.load %arg4[%c0_5, %c0_6] : memref<8x8xf32, #tpu.memory_space<vmem>>, vector<8x8xf32>
    tpu.vector_store %arg4[%c0_5, %c0_6], %5 {strides = array<i32>} : memref<8x8xf32, #tpu.memory_space<vmem>>, vector<8x8xf32>,
    %c0_7 = arith.constant 0 : index
    %c0_8 = arith.constant 0 : index
    %7 = vector.load %arg3[%c0_7, %c0_8] : memref<1x8xf32, #tpu.memory_space<vmem>>, vector<1x8xf32>
    %8 = math.exp %7 : vector<1x8xf32>
    %c0_9 = arith.constant 0 : index
    %c0_10 = arith.constant 0 : index
    %9 = vector.load %arg5[%c0_9, %c0_10] : memref<1x8xf32, #tpu.memory_space<vmem>>, vector<1x8xf32>
    tpu.vector_store %arg5[%c0_9, %c0_10], %8 {strides = array<i32>} : memref<1x8xf32, #tpu.memory_space<vmem>>, vector<1x8xf32>,
    return
  }
}

</mosaic_0001>

<llo_original>
// kernel: tpu_custom_call.1
$region0: #{tpu_custom_call.1}
  #allocation0 [shape = 'u32[]', space=smem, size = 0x4, offset = 0x4, fixed_abs, tag = 'smem constant byte address 0x4 - core index']
  #allocation1 [shape = 'u32[144,128]{1,0:T(1,128)}', space=vmem, size = 0x12000, scoped, tag = 'internal scratch']
  %s0 = inlined_call_operand.vmem [shape: f32[8,32], index: 0, kind: input, shape index: {}]
  %s1 = inlined_call_operand.vmem [shape: f32[32,8], index: 1, kind: input, shape index: {}]
  %s2 = inlined_call_operand.vmem [shape: f32[1,8], index: 2, kind: input, shape index: {}]
  %s3 = inlined_call_operand.vmem [shape: f32[1,8], index: 3, kind: input, shape index: {}]
  %s4 = inlined_call_operand.hbm [shape: f32[8,8], index: 4, kind: output, shape index: {0}]
  %s5 = inlined_call_operand.hbm [shape: f32[1,8], index: 5, kind: output, shape index: {1}]
  %6 = xla_tuple %s4, %s5
  %s7 = sld [smem:[#allocation0]]
  $region34: #{tpu_custom_call.1} parent=0
    _
  %s9 = ssub.s32 1, %s7
  %s10 = scalar_select 0, %s9, %s7
  $region1: #{tpu_custom_call.1} parent=0
    #allocation2 [shape = 'u8[4096]{0}', space=vmem, size = 0x1000, scoped, tag = 'output window, operand 0, single buffered']
    #allocation3 [shape = 's32[1]{0}', space=sflag, size = 0x4, scoped, tag = 'scoped memory for tpu_custom_call.1']
    #allocation4 [shape = 'u8[512]{0}', space=vmem, size = 0x400, scoped, tag = 'output window, operand 1, single buffered']
    #allocation5 [shape = 's32[1]{0}', space=sflag, size = 0x4, scoped, tag = 'scoped memory for tpu_custom_call.1']
    %11 = vsyncpa [#allocation3], 0
    %12 = vsyncpa [#allocation5], 0
    // Predicated region
    $region2: #{tpu_custom_call.1} parent=1 // pred_check
      _
    $region3: #{tpu_custom_call.1} parent=1 // pred_check_branch
      %14 = sbr.rel (0) target = $region5
    $region4: #{tpu_custom_call.1} parent=1 // pred_region
      _
    $region5: #{tpu_custom_call.1} parent=1 // pred_fallthru
      _
    // Predicated region
    $region6: #{tpu_custom_call.1} parent=1 // pred_check
      _
    $region7: #{tpu_custom_call.1} parent=1 // pred_check_branch
      %16 = sbr.rel (0) target = $region9
    $region8: #{tpu_custom_call.1} parent=1 // pred_region
      _
    $region9: #{tpu_custom_call.1} parent=1 // pred_fallthru
      _
    // Predicated region
    $region10: #{tpu_custom_call.1} parent=1 // pred_check
      _
    $region11: #{tpu_custom_call.1} parent=1 // pred_check_branch
      %18 = sbr.rel (0) target = $region13
    $region12: #{tpu_custom_call.1} parent=1 // pred_region
      _
    $region13: #{tpu_custom_call.1} parent=1 // pred_fallthru
      _
    // Predicated region
    $region14: #{tpu_custom_call.1} parent=1 // pred_check
      _
    $region15: #{tpu_custom_call.1} parent=1 // pred_check_branch
      %20 = sbr.rel (0) target = $region17
    $region16: #{tpu_custom_call.1} parent=1 // pred_region
      _
    $region17: #{tpu_custom_call.1} parent=1 // pred_fallthru
      _
    %v21 = vld [vmem:[%s0] sm:$0xff]
    %v22 = vld [vmem:[%s1] sm:$0xff]
    %v23 = vld [vmem:[%s1 + $0x8] sm:$0xff]
    %v24 = vld [vmem:[%s1 + $0x10] sm:$0xff]
    %v25 = vld [vmem:[%s1 + $0x18] sm:$0xff]
    %v26 = vld [vmem:[%s2] sm:$0x1]
    %v28 = vlaneseq
    %v29 = vshrl.u32 %v28, 7
    %v30 = vsub.s32 0, %v29
    %v31 = vrot.slane %v26, %v30
    %vm33 = vcmask 261120
    %v35 = vsel %vm33, %v21, 0
    %37 = vmatprep.subr.mxu0 0.0
    %38 = vmatpush1.msra.mxu0 0.0
    %39 = vmatprep.subr.mxu0 0.0
    %40 = vmatpush1.msra.mxu0 0.0
    %41 = vmatprep.subr.mxu0 0.0
    %42 = vmatpush1.msra.mxu0 0.0
    %43 = vmatprep.subr.mxu0 0.0
    %44 = vmatpush1.msra.mxu0 0.0
    %45 = vmatprep.subr.mxu0 0.0
    %46 = vmatpush1.msra.mxu0 0.0
    %47 = vmatprep.subr.mxu0 0.0
    %48 = vmatpush1.msra.mxu0 0.0
    %49 = vmatprep.subr.mxu0 0.0
    %50 = vmatpush1.msra.mxu0 0.0
    %51 = vmatprep.subr.mxu0 0.0
    %52 = vmatpush1.msra.mxu0 0.0
    %53 = vmatprep.subr.mxu0 0.0
    %54 = vmatpush1.msra.mxu0 0.0
    %55 = vmatprep.subr.mxu0 0.0
    %56 = vmatpush1.msra.mxu0 0.0
    %57 = vmatprep.subr.mxu0 0.0
    %58 = vmatpush1.msra.mxu0 0.0
    %59 = vmatprep.subr.mxu0 0.0
    %60 = vmatpush1.msra.mxu0 0.0
    %61 = vmatprep.subr.mxu0 0.0
    %62 = vmatpush1.msra.mxu0 %v25
    %63 = vmatprep.subr.mxu0 0.0
    %64 = vmatpush1.msra.mxu0 %v24
    %65 = vmatprep.subr.mxu0 0.0
    %66 = vmatpush1.msra.mxu0 %v23
    %67 = vmatprep.subr.mxu0 0.0
    %68 = vmatpush1.msra.mxu0 %v22
    %69 = vmatprep.subr.mxu0 0.0
    %70 = vmatpush2.msra.mxu0 0.0
    %71 = vmatprep.subr.mxu0 0.0
    %72 = vmatpush2.msra.mxu0 0.0
    %73 = vmatprep.subr.mxu0 0.0
    %74 = vmatpush2.msra.mxu0 0.0
    %75 = vmatprep.subr.mxu0 0.0
    %76 = vmatpush2.msra.mxu0 0.0
    %77 = vmatprep.subr.mxu0 0.0
    %78 = vmatpush2.msra.mxu0 0.0
    %79 = vmatprep.subr.mxu0 0.0
    %80 = vmatpush2.msra.mxu0 0.0
    %81 = vmatprep.subr.mxu0 0.0
    %82 = vmatpush2.msra.mxu0 0.0
    %83 = vmatprep.subr.mxu0 0.0
    %84 = vmatpush2.msra.mxu0 0.0
    %85 = vmatprep.subr.mxu0 0.0
    %86 = vmatpush2.msra.mxu0 0.0
    %87 = vmatprep.subr.mxu0 0.0
    %88 = vmatpush2.msra.mxu0 0.0
    %89 = vmatprep.subr.mxu0 0.0
    %90 = vmatpush2.msra.mxu0 0.0
    %91 = vmatprep.subr.mxu0 0.0
    %92 = vmatpush2.msra.mxu0 0.0
    %93 = vmatprep.subr.mxu0 0.0
    %94 = vmatpush2.msra.mxu0 0.0
    %95 = vmatprep.subr.mxu0 0.0
    %96 = vmatpush2.msra.mxu0 0.0
    %97 = vmatprep.subr.mxu0 0.0
    %98 = vmatpush2.msra.mxu0 0.0
    %99 = vmatprep.subr.mxu0 0.0
    %100 = vmatpush2.msra.mxu0 0.0
    %101 = vmatprep.mubr.f32.mxu0 0.0
    %102 = vmatmul.mubr.f32.gmra.mxu0 %v35
    %v103 = vpop.f32.mrf.mxu0
    %v104 = vadd.f32 %v31, %v103
    %v105 = vpop.f32.mrf.mxu0
    %106 = vdwg.mxu0
    %vm107 = vcmask 64512
    %108 = vst.msk [vmem:[#allocation2] sm:$0xff] %vm107, %v104
    %v109 = vld [vmem:[%s3] sm:$0x1]
    %v110 = vmul.f32 %v109, 1.442695
    %v111 = vpow.pop %v110
    %vm112 = vcmask 57344
    %113 = vst.msk [vmem:[#allocation4] sm:$0x1] %vm112, %v111
    // Predicated region
    $region18: #{tpu_custom_call.1} parent=1 // pred_check
      _
    $region19: #{tpu_custom_call.1} parent=1 // pred_check_branch
      %115 = sbr.rel (0) target = $region21
    $region20: #{tpu_custom_call.1} parent=1 // pred_region
      %s117 = ssub.s32 128, 128
      %118 = vsyncadd [#allocation3], %s117
      %s120 = sshll.u32 [#allocation2], 4
      %s121 = int_to_ptr.vmem [resolvable:$true] %s120
      %123 = dma.vmem_to_hbm [thread:$0]  %s121, 128, %s4, [#allocation3]
    $region21: #{tpu_custom_call.1} parent=1 // pred_fallthru
      _
    // Predicated region
    $region22: #{tpu_custom_call.1} parent=1 // pred_check
      _
    $region23: #{tpu_custom_call.1} parent=1 // pred_check_branch
      %125 = sbr.rel (0) target = $region25
    $region24: #{tpu_custom_call.1} parent=1 // pred_region
      %s127 = ssub.s32 16, 16
      %128 = vsyncadd [#allocation5], %s127
      %s130 = sshll.u32 [#allocation4], 4
      %s131 = int_to_ptr.vmem [resolvable:$true] %s130
      %133 = dma.vmem_to_hbm [thread:$0]  %s131, 16, %s5, [#allocation5]
    $region25: #{tpu_custom_call.1} parent=1 // pred_fallthru
      _
    // Predicated region
    $region26: #{tpu_custom_call.1} parent=1 // pred_check
      _
    $region27: #{tpu_custom_call.1} parent=1 // pred_check_branch
      %135 = sbr.rel (0) target = $region29
    $region28: #{tpu_custom_call.1} parent=1 // pred_region
      %136 = dma.done [#allocation3], 128
    $region29: #{tpu_custom_call.1} parent=1 // pred_fallthru
      _
    // Predicated region
    $region30: #{tpu_custom_call.1} parent=1 // pred_check
      _
    $region31: #{tpu_custom_call.1} parent=1 // pred_check_branch
      %138 = sbr.rel (0) target = $region33
    $region32: #{tpu_custom_call.1} parent=1 // pred_region
      %139 = dma.done [#allocation5], 16
    $region33: #{tpu_custom_call.1} parent=1 // pred_fallthru
      _
    %140 = vsyncpa [#allocation3], 1
    %141 = vsyncpa [#allocation5], 1

</llo_original>
